<compile_context>
chip_gen: v7x
topology: tpu7x:2x2x1
jax: 0.10.0
libtpu: 0.0.40
codegen_flags: <defaults>
</compile_context>

<pallas_src>
import math
import functools

import jax
import jax.numpy as jnp
from jax import lax
from jax.experimental import pallas as pl
from jax.experimental.pallas import tpu as pltpu


# ----------------------------------------------------------------------------
# helpers
# ----------------------------------------------------------------------------
_INV_SQRT2 = 0.7071067811865475  # 1/sqrt(2) as a multiply constant (no divide)


def _gelu_exact(x):
    # nn.GELU() default = exact (erf-based) GELU
    return 0.5 * x * (1.0 + lax.erf(x * _INV_SQRT2))


def _round_up(n, m):
    return ((n + m - 1) // m) * m


# ----------------------------------------------------------------------------
# Kernel 1: ProjectionHead (row-tiled)
#   projected = x @ W1 + b1 ; h = gelu(projected) ; h = h @ W2 + b2 (dropout p=0 -> id)
#   h = h + projected ; out = LayerNorm(h) (eps=1e-5, affine)
# ----------------------------------------------------------------------------
def projection_head_kernel(x_ref, w1_ref, b1_ref, w2_ref, b2_ref, g_ref, be_ref, o_ref,
                           *, mxu_dtype):
    x = x_ref[...]                                               # [TM, E]
    proj = jnp.dot(x.astype(mxu_dtype), w1_ref[...].astype(mxu_dtype),
                   preferred_element_type=jnp.float32) + b1_ref[...]
    h = _gelu_exact(proj)
    h = jnp.dot(h.astype(mxu_dtype), w2_ref[...].astype(mxu_dtype),
                preferred_element_type=jnp.float32) + b2_ref[...]
    h = h + proj
    # single-pass LayerNorm statistics (one cross-lane reduction pass)
    pdim = h.shape[-1]
    s1 = jnp.sum(h, axis=-1, keepdims=True)
    s2 = jnp.sum(h * h, axis=-1, keepdims=True)
    mean = s1 * (1.0 / pdim)
    var = s2 * (1.0 / pdim) - mean * mean
    normed = (h - mean) * lax.rsqrt(var + 1e-5)
    o_ref[...] = normed * g_ref[...] + be_ref[...]


def projection_head(x, w1, b1, w2, b2, gamma, beta, *, block_rows=256,
                    mxu_dtype=jnp.float32):
    """x: [N, E] -> [N, P]  (apply to flattened (B*T, E) for 3-D inputs)."""
    N, E = x.shape
    P = w1.shape[1]
    tm = N if N <= block_rows else block_rows     # row tile (full N at demo scale)
    grid = (pl.cdiv(N, tm),)
    b1r, b2r = b1.reshape(1, P), b2.reshape(1, P)
    gr, br = gamma.reshape(1, P), beta.reshape(1, P)

    def _const(shape):
        return pl.BlockSpec(shape, lambda i: (0, 0))   # resident across the grid

    kernel = functools.partial(projection_head_kernel, mxu_dtype=mxu_dtype)
    return pl.pallas_call(
        kernel,
        out_shape=jax.ShapeDtypeStruct((N, P), jnp.float32),
        grid=grid,
        in_specs=[
            pl.BlockSpec((tm, E), lambda i: (i, 0)),
            _const((E, P)), _const((1, P)),
            _const((P, P)), _const((1, P)),
            _const((1, P)), _const((1, P)),
        ],
        out_specs=pl.BlockSpec((tm, P), lambda i: (i, 0)),
        compiler_params=pltpu.CompilerParams(dimension_semantics=("parallel",)),
    )(x, w1, b1r, w2, b2r, gr, br)


# ----------------------------------------------------------------------------
# Kernel 2: calc_logit tail (post fusing-encoder) + get_similar_patient
#   seq_emb  = sum_t sequence_contexts * mask
#   text_emb = text_contexts[:, 0, :]         (CLS row sliced in the wrapper; kernel never
#                                              sees the [B, Tt, D] tensor)
#   inner    = seq_emb @ patient_visits       [B, P_pad]  (padded cols masked with -inf)
#   attn_pos =  softmax(inner) ; attn_neg = -softmax(-inner)
#   emb_pos  = attn_pos @ patient_texts.T ; emb_neg = attn_neg @ patient_texts.T
#   logits   = concat([seq_emb, text_emb, emb_pos, emb_neg]) @ Wc_pad + bc_pad
#   dropout is identity at inference.
# ----------------------------------------------------------------------------
def calc_logit_tail_kernel(seq_ctx_ref, mask_ref, cls_ref, pv_ref, ptT_ref,
                           wc_ref, bc_ref,
                           logits_ref, seq_emb_ref, text_emb_ref,
                           *, n_valid, mxu_dtype):
    seq_ctx = seq_ctx_ref[...]                                   # [TB, Tv, D]
    mask = mask_ref[...]                                         # [TB, Tv] lane-dense
    seq_emb = jnp.sum(seq_ctx * mask[:, :, None], axis=1)        # [TB, D]
    text_emb = cls_ref[...]                                      # [TB, D]

    pv = pv_ref[...]                                             # [D, P_pad]
    ptT = ptT_ref[...]                                           # [P_pad, D]
    inner = jnp.dot(seq_emb.astype(mxu_dtype), pv.astype(mxu_dtype),
                    preferred_element_type=jnp.float32)          # [TB, P_pad]

    p_pad = inner.shape[-1]
    if n_valid < p_pad:
        col_valid = lax.broadcasted_iota(jnp.int32, (1, p_pad), 1) < n_valid
    else:
        col_valid = None

    def _softmax(z):
        if col_valid is not None:
            z = jnp.where(col_valid, z, jnp.float32(-1e30))
        z = z - jnp.max(z, axis=-1, keepdims=True)
        e = jnp.exp(z)
        return e * pl.reciprocal(jnp.sum(e, axis=-1, keepdims=True), approx=True)

    attn_pos = _softmax(inner)
    attn_neg = -_softmax(-inner)
    emb_pos = jnp.dot(attn_pos.astype(mxu_dtype), ptT.astype(mxu_dtype),
                      preferred_element_type=jnp.float32)        # [TB, D]
    emb_neg = jnp.dot(attn_neg.astype(mxu_dtype), ptT.astype(mxu_dtype),
                      preferred_element_type=jnp.float32)        # [TB, D]

    # single classifier matmul on the concatenated embedding (concat order matches torch.cat)
    all_emb = jnp.concatenate([seq_emb, text_emb, emb_pos, emb_neg], axis=1)   # [TB, 4D]
    logits_ref[...] = (jnp.dot(all_emb.astype(mxu_dtype), wc_ref[...].astype(mxu_dtype),
                               preferred_element_type=jnp.float32) + bc_ref[...])
    seq_emb_ref[...] = seq_emb
    text_emb_ref[...] = text_emb


def calc_logit_tail(sequence_contexts, mask_final, text_contexts,
                    patient_visits_pad, patient_texts_T_pad, wc_pad, bc_pad,
                    n_patients, label_num, *, block_batch=128,
                    mxu_dtype=jnp.float32):
    B, Tv, D = sequence_contexts.shape
    P_pad = patient_visits_pad.shape[1]
    L_pad = wc_pad.shape[1]

    mask2d = mask_final.reshape(B, Tv)              # lane-dense mask, no [B,Tv,1] padding
    text_cls = text_contexts[:, 0, :]               # only the CLS row enters the kernel

    tb = B if B <= block_batch else block_batch
    grid = (pl.cdiv(B, tb),)

    def _const(shape):
        return pl.BlockSpec(shape, lambda i: (0, 0))

    kernel = functools.partial(calc_logit_tail_kernel,
                               n_valid=n_patients, mxu_dtype=mxu_dtype)
    out_shapes = (
        jax.ShapeDtypeStruct((B, L_pad), jnp.float32),   # logits (lane-padded)
        jax.ShapeDtypeStruct((B, D), jnp.float32),       # sequence_embedding
        jax.ShapeDtypeStruct((B, D), jnp.float32),       # text_embedding
    )
    logits_pad, seq_emb, text_emb = pl.pallas_call(
        kernel,
        out_shape=out_shapes,
        grid=grid,
        in_specs=[
            pl.BlockSpec((tb, Tv, D), lambda i: (i, 0, 0)),
            pl.BlockSpec((tb, Tv), lambda i: (i, 0)),
            pl.BlockSpec((tb, D), lambda i: (i, 0)),
            _const((D, P_pad)),
            _const((P_pad, D)),
            _const((4 * D, L_pad)),
            _const((1, L_pad)),
        ],
        out_specs=(
            pl.BlockSpec((tb, L_pad), lambda i: (i, 0)),
            pl.BlockSpec((tb, D), lambda i: (i, 0)),
            pl.BlockSpec((tb, D), lambda i: (i, 0)),
        ),
        compiler_params=pltpu.CompilerParams(dimension_semantics=("parallel",)),
    )(sequence_contexts, mask2d, text_cls, patient_visits_pad,
      patient_texts_T_pad, wc_pad, bc_pad)

    return logits_pad[:, :label_num], seq_emb, text_emb


# ----------------------------------------------------------------------------
# Pure-JAX references (for correctness check)
# ----------------------------------------------------------------------------
def projection_head_ref(x, w1, b1, w2, b2, gamma, beta):
    proj = x @ w1 + b1
    h = _gelu_exact(proj)
    h = h @ w2 + b2
    h = h + proj
    mean = jnp.mean(h, axis=-1, keepdims=True)
    var = jnp.mean((h - mean) ** 2, axis=-1, keepdims=True)
    return (h - mean) / jnp.sqrt(var + 1e-5) * gamma + beta


def calc_logit_tail_ref(seq_ctx, mask_final, text_ctx, pv, pt, wc, bc):
    seq_emb = jnp.sum(seq_ctx * mask_final, axis=1)
    text_emb = text_ctx[:, 0, :]
    inner = seq_emb @ pv
    attn_pos = jax.nn.softmax(inner, axis=-1)
    attn_neg = -jax.nn.softmax(-inner, axis=-1)
    emb_pos = attn_pos @ pt.T
    emb_neg = attn_neg @ pt.T
    all_emb = jnp.concatenate([seq_emb, text_emb, emb_pos, emb_neg], axis=1)
    logits = all_emb @ wc + bc
    return logits, seq_emb, text_emb


# ----------------------------------------------------------------------------
# main
# ----------------------------------------------------------------------------
if __name__ == "__main__":
    key = jax.random.PRNGKey(0)

    # small shapes consistent with the module
    B = 2            # batch
    Tv = 8           # max_visit_len
    Tt = 8           # max_notes_len
    D = 32           # text_embed == hita_input_size
    PROJ = 32        # args.projection_dim
    P = 16           # train_patient_num (memory bank size)
    L = 5            # label_num

    ks = jax.random.split(key, 12)

    # encoder outputs (stand-ins for the undefined sub-encoders)
    sequence_contexts = jax.random.normal(ks[0], (B, Tv, D), jnp.float32)
    text_contexts = jax.random.normal(ks[1], (B, Tt, D), jnp.float32)
    # mask_final: 1.0 for valid visits, 0.0 for padding
    lens = jnp.array([5, 8], dtype=jnp.int32)
    mask_final = (jnp.arange(Tv)[None, :] < lens[:, None]).astype(jnp.float32)[:, :, None]

    # deterministic parameter init (xavier-uniform-like)
    def xavier(k, shape):
        fan_in, fan_out = shape[0], shape[1]
        lim = math.sqrt(6.0 / (fan_in + fan_out))
        return jax.random.uniform(k, shape, jnp.float32, -lim, lim)

    # ProjectionHead params (stored as [in, out] = PyTorch weight.T)
    ph_w1 = xavier(ks[2], (D, PROJ))
    ph_b1 = jnp.zeros((PROJ,), jnp.float32)
    ph_w2 = xavier(ks[3], (PROJ, PROJ))
    ph_b2 = jnp.zeros((PROJ,), jnp.float32)
    ph_gamma = jnp.ones((PROJ,), jnp.float32)
    ph_beta = jnp.zeros((PROJ,), jnp.float32)

    # patient memory banks (register_buffers, xavier-initialized in _init_weight)
    patient_visits = xavier(ks[4], (D, P))
    patient_texts = xavier(ks[5], (D, P))

    # classifier: in = 3*text_embed + hita_input_size = 4*D, out = label_num
    wc = xavier(ks[6], (4 * D, L))
    bc = jnp.zeros((L,), jnp.float32)

    # --- one-time (init) lane-alignment of the constant buffers ---
    # pad P and L to multiples of 128, precompute patient_texts.T (buffer, not activation)
    P_pad = _round_up(P, 128)
    L_pad = _round_up(L, 128)
    patient_visits_pad = jnp.zeros((D, P_pad), jnp.float32).at[:, :P].set(patient_visits)
    patient_texts_T_pad = jnp.zeros((P_pad, D), jnp.float32).at[:P, :].set(patient_texts.T)
    wc_pad = jnp.zeros((4 * D, L_pad), jnp.float32).at[:, :L].set(wc)
    bc_pad = jnp.zeros((1, L_pad), jnp.float32).at[:, :L].set(bc.reshape(1, L))

    # --- run Pallas kernels ---
    # ProjectionHead on the (flattened) visit contexts, as in calc_cl_loss
    ph_in = sequence_contexts.reshape(B * Tv, D)
    ph_out = projection_head(ph_in, ph_w1, ph_b1, ph_w2, ph_b2, ph_gamma, ph_beta)
    ph_out = jax.block_until_ready(ph_out)

    logits, seq_emb, text_emb = calc_logit_tail(
        sequence_contexts, mask_final, text_contexts,
        patient_visits_pad, patient_texts_T_pad, wc_pad, bc_pad,
        n_patients=P, label_num=L)
    logits, seq_emb, text_emb = jax.block_until_ready((logits, seq_emb, text_emb))

    # --- verify against pure-JAX references ---
    ph_ref = projection_head_ref(ph_in, ph_w1, ph_b1, ph_w2, ph_b2, ph_gamma, ph_beta)
    logits_ref, seq_ref, text_ref = calc_logit_tail_ref(
        sequence_contexts, mask_final, text_contexts, patient_visits, patient_texts, wc, bc)

    assert jnp.allclose(ph_out, ph_ref, atol=5e-4, rtol=5e-4)
    # logits use the EUP approximate reciprocal in the softmax -> slightly looser tolerance
    assert jnp.allclose(logits, logits_ref, atol=2e-2, rtol=2e-2)
    assert jnp.allclose(seq_emb, seq_ref, atol=1e-4, rtol=1e-4)
    assert jnp.allclose(text_emb, text_ref, atol=1e-4, rtol=1e-4)

    print("KERNEL_OK")
</pallas_src>

<mosaic_0001>
module attributes {stable_mosaic.version = 11 : i64} {
  func.func @projection_head_kernel(%arg0: i32, %arg1: memref<16x32xf32, #tpu.memory_space<vmem>>, %arg2: memref<32x32xf32, #tpu.memory_space<vmem>>, %arg3: memref<1x32xf32, #tpu.memory_space<vmem>>, %arg4: memref<32x32xf32, #tpu.memory_space<vmem>>, %arg5: memref<1x32xf32, #tpu.memory_space<vmem>>, %arg6: memref<1x32xf32, #tpu.memory_space<vmem>>, %arg7: memref<1x32xf32, #tpu.memory_space<vmem>>, %arg8: memref<16x32xf32, #tpu.memory_space<vmem>>) attributes {dimension_semantics = [#tpu.dimension_semantics<parallel>], iteration_bounds = array<i64: 1>, scalar_prefetch = 0 : i64, scratch_operands = 0 : i64, tpu.core_type = #tpu.core_type<tc>, window_params = [{transform_indices = @transform_0, window_bounds = array<i64: 16, 32>}, {pipeline_mode = #tpu.pipeline_mode<synchronous>, transform_indices = @transform_1, window_bounds = array<i64: 32, 32>}, {pipeline_mode = #tpu.pipeline_mode<synchronous>, transform_indices = @transform_2, window_bounds = array<i64: 1, 32>}, {pipeline_mode = #tpu.pipeline_mode<synchronous>, transform_indices = @transform_3, window_bounds = array<i64: 32, 32>}, {pipeline_mode = #tpu.pipeline_mode<synchronous>, transform_indices = @transform_4, window_bounds = array<i64: 1, 32>}, {pipeline_mode = #tpu.pipeline_mode<synchronous>, transform_indices = @transform_5, window_bounds = array<i64: 1, 32>}, {pipeline_mode = #tpu.pipeline_mode<synchronous>, transform_indices = @transform_6, window_bounds = array<i64: 1, 32>}, {transform_indices = @transform_7, window_bounds = array<i64: 16, 32>}]} {
    %c0 = arith.constant 0 : index
    %c0_0 = arith.constant 0 : index
    %0 = vector.load %arg1[%c0, %c0_0] : memref<16x32xf32, #tpu.memory_space<vmem>>, vector<16x32xf32>
    %c0_1 = arith.constant 0 : index
    %c0_2 = arith.constant 0 : index
    %1 = vector.load %arg2[%c0_1, %c0_2] : memref<32x32xf32, #tpu.memory_space<vmem>>, vector<32x32xf32>
    %cst = arith.constant dense<0.000000e+00> : vector<16x32xf32>
    %2 = tpu.matmul %0, %1, %cst {dimension_numbers = #tpu.dot_dimension_numbers<[1], [0], [0], [1], [0, 0, 1, 1], [], []>} : vector<16x32xf32>, vector<32x32xf32>, vector<16x32xf32> -> vector<16x32xf32>
    %c0_3 = arith.constant 0 : index
    %c0_4 = arith.constant 0 : index
    %3 = vector.load %arg3[%c0_3, %c0_4] : memref<1x32xf32, #tpu.memory_space<vmem>>, vector<1x32xf32>
    %4 = vector.broadcast %3 : vector<1x32xf32> to vector<16x32xf32>
    %5 = arith.addf %2, %4 : vector<16x32xf32>
    %cst_5 = arith.constant 5.000000e-01 : f32
    %6 = vector.broadcast %cst_5 : f32 to vector<16x32xf32>
    %7 = arith.mulf %6, %5 : vector<16x32xf32>
    %cst_6 = arith.constant 0.707106769 : f32
    %8 = vector.broadcast %cst_6 : f32 to vector<16x32xf32>
    %9 = arith.mulf %5, %8 : vector<16x32xf32>
    %10 = math.erf %9 : vector<16x32xf32>
    %cst_7 = arith.constant 1.000000e+00 : f32
    %11 = vector.broadcast %cst_7 : f32 to vector<16x32xf32>
    %12 = arith.addf %11, %10 : vector<16x32xf32>
    %13 = arith.mulf %7, %12 : vector<16x32xf32>
    %c0_8 = arith.constant 0 : index
    %c0_9 = arith.constant 0 : index
    %14 = vector.load %arg4[%c0_8, %c0_9] : memref<32x32xf32, #tpu.memory_space<vmem>>, vector<32x32xf32>
    %cst_10 = arith.constant dense<0.000000e+00> : vector<16x32xf32>
    %15 = tpu.matmul %13, %14, %cst_10 {dimension_numbers = #tpu.dot_dimension_numbers<[1], [0], [0], [1], [0, 0, 1, 1], [], []>} : vector<16x32xf32>, vector<32x32xf32>, vector<16x32xf32> -> vector<16x32xf32>
    %c0_11 = arith.constant 0 : index
    %c0_12 = arith.constant 0 : index
    %16 = vector.load %arg5[%c0_11, %c0_12] : memref<1x32xf32, #tpu.memory_space<vmem>>, vector<1x32xf32>
    %17 = vector.broadcast %16 : vector<1x32xf32> to vector<16x32xf32>
    %18 = arith.addf %15, %17 : vector<16x32xf32>
    %19 = arith.addf %18, %5 : vector<16x32xf32>
    %cst_13 = arith.constant dense<0.000000e+00> : vector<16xf32>
    %20 = vector.multi_reduction <add>, %19, %cst_13 [1] : vector<16x32xf32> to vector<16xf32>
    %21 = vector.shape_cast %20 : vector<16xf32> to vector<16x1xf32>
    %22 = arith.mulf %19, %19 : vector<16x32xf32>
    %cst_14 = arith.constant dense<0.000000e+00> : vector<16xf32>
    %23 = vector.multi_reduction <add>, %22, %cst_14 [1] : vector<16x32xf32> to vector<16xf32>
    %24 = vector.shape_cast %23 : vector<16xf32> to vector<16x1xf32>
    %cst_15 = arith.constant 3.125000e-02 : f32
    %25 = vector.broadcast %cst_15 : f32 to vector<16x1xf32>
    %26 = arith.mulf %21, %25 : vector<16x1xf32>
    %cst_16 = arith.constant 3.125000e-02 : f32
    %27 = vector.broadcast %cst_16 : f32 to vector<16x1xf32>
    %28 = arith.mulf %24, %27 : vector<16x1xf32>
    %29 = arith.mulf %26, %26 : vector<16x1xf32>
    %30 = arith.subf %28, %29 : vector<16x1xf32>
    %31 = vector.broadcast %26 : vector<16x1xf32> to vector<16x32xf32>
    %32 = arith.subf %19, %31 : vector<16x32xf32>
    %cst_17 = arith.constant 9.99999974E-6 : f32
    %33 = vector.broadcast %cst_17 : f32 to vector<16x1xf32>
    %34 = arith.addf %30, %33 : vector<16x1xf32>
    %35 = math.rsqrt %34 : vector<16x1xf32>
    %36 = vector.broadcast %35 : vector<16x1xf32> to vector<16x32xf32>
    %37 = arith.mulf %32, %36 : vector<16x32xf32>
    %c0_18 = arith.constant 0 : index
    %c0_19 = arith.constant 0 : index
    %38 = vector.load %arg6[%c0_18, %c0_19] : memref<1x32xf32, #tpu.memory_space<vmem>>, vector<1x32xf32>
    %39 = vector.broadcast %38 : vector<1x32xf32> to vector<16x32xf32>
    %40 = arith.mulf %37, %39 : vector<16x32xf32>
    %c0_20 = arith.constant 0 : index
    %c0_21 = arith.constant 0 : index
    %41 = vector.load %arg7[%c0_20, %c0_21] : memref<1x32xf32, #tpu.memory_space<vmem>>, vector<1x32xf32>
    %42 = vector.broadcast %41 : vector<1x32xf32> to vector<16x32xf32>
    %43 = arith.addf %40, %42 : vector<16x32xf32>
    %c0_22 = arith.constant 0 : index
    %c0_23 = arith.constant 0 : index
    %44 = vector.load %arg8[%c0_22, %c0_23] : memref<16x32xf32, #tpu.memory_space<vmem>>, vector<16x32xf32>
    tpu.vector_store %arg8[%c0_22, %c0_23], %43 {strides = array<i32>} : memref<16x32xf32, #tpu.memory_space<vmem>>, vector<16x32xf32>,
    return
  }
  func.func @transform_0(%arg0: i32) -> (i32, i32) {
    %c0_i32 = arith.constant 0 : i32
    %c0_i32_0 = arith.constant 0 : i32
    return %arg0, %c0_i32 : i32, i32
  }
  func.func @transform_1(%arg0: i32) -> (i32, i32) {
    %c0_i32 = arith.constant 0 : i32
    %c0_i32_0 = arith.constant 0 : i32
    %c0_i32_1 = arith.constant 0 : i32
    return %c0_i32, %c0_i32_0 : i32, i32
  }
  func.func @transform_2(%arg0: i32) -> (i32, i32) {
    %c0_i32 = arith.constant 0 : i32
    %c0_i32_0 = arith.constant 0 : i32
    %c0_i32_1 = arith.constant 0 : i32
    return %c0_i32, %c0_i32_0 : i32, i32
  }
  func.func @transform_3(%arg0: i32) -> (i32, i32) {
    %c0_i32 = arith.constant 0 : i32
    %c0_i32_0 = arith.constant 0 : i32
    %c0_i32_1 = arith.constant 0 : i32
    return %c0_i32, %c0_i32_0 : i32, i32
  }
  func.func @transform_4(%arg0: i32) -> (i32, i32) {
    %c0_i32 = arith.constant 0 : i32
    %c0_i32_0 = arith.constant 0 : i32
    %c0_i32_1 = arith.constant 0 : i32
    return %c0_i32, %c0_i32_0 : i32, i32
  }
  func.func @transform_5(%arg0: i32) -> (i32, i32) {
    %c0_i32 = arith.constant 0 : i32
    %c0_i32_0 = arith.constant 0 : i32
    %c0_i32_1 = arith.constant 0 : i32
    return %c0_i32, %c0_i32_0 : i32, i32
  }
  func.func @transform_6(%arg0: i32) -> (i32, i32) {
    %c0_i32 = arith.constant 0 : i32
    %c0_i32_0 = arith.constant 0 : i32
    %c0_i32_1 = arith.constant 0 : i32
    return %c0_i32, %c0_i32_0 : i32, i32
  }
  func.func @transform_7(%arg0: i32) -> (i32, i32) {
    %c0_i32 = arith.constant 0 : i32
    %c0_i32_0 = arith.constant 0 : i32
    return %arg0, %c0_i32 : i32, i32
  }
}

</mosaic_0001>

<llo_original>
// kernel: tpu_custom_call.1
$region0: #{tpu_custom_call.1}
  #allocation0 [shape = 'u32[]', space=smem, size = 0x4, offset = 0x4, fixed_abs, tag = 'smem constant byte address 0x4 - core index']
  #allocation1 [shape = 'u32[144,128]{1,0:T(1,128)}', space=vmem, size = 0x12000, scoped, tag = 'internal scratch']
  %s0 = inlined_call_operand.hbm [shape: f32[16,32], index: 0, kind: input, shape index: {}]
  %s1 = inlined_call_operand.hbm [shape: f32[32,32], index: 1, kind: input, shape index: {}]
  %s2 = inlined_call_operand.vmem [shape: f32[1,32], index: 2, kind: input, shape index: {}]
  %s3 = inlined_call_operand.hbm [shape: f32[32,32], index: 3, kind: input, shape index: {}]
  %s4 = inlined_call_operand.vmem [shape: f32[1,32], index: 4, kind: input, shape index: {}]
  %s5 = inlined_call_operand.vmem [shape: f32[1,32], index: 5, kind: input, shape index: {}]
  %s6 = inlined_call_operand.vmem [shape: f32[1,32], index: 6, kind: input, shape index: {}]
  %s7 = inlined_call_operand.hbm [shape: f32[16,32], index: 7, kind: output, shape index: {}]
  %s8 = sld [smem:[#allocation0]]
  $region50: #{tpu_custom_call.1} parent=0
    _
  %s10 = ssub.s32 1, %s8
  %s11 = scalar_select 0, %s10, %s8
  $region1: #{tpu_custom_call.1} parent=0
    #allocation2 [shape = 'u8[8192]{0}', space=vmem, size = 0x2000, scoped, tag = 'input window, operand 0, single buffered']
    #allocation3 [shape = 's32[1]{0}', space=sflag, size = 0x4, scoped, tag = 'scoped memory for tpu_custom_call.1']
    #allocation4 [shape = 's32[1]{0}', space=sflag, size = 0x4, scoped, tag = 'scoped memory for tpu_custom_call.1']
    #allocation5 [shape = 'u8[16384]{0}', space=vmem, size = 0x4000, scoped, tag = 'input window, operand 1, single buffered']
    #allocation6 [shape = 's32[1]{0}', space=sflag, size = 0x4, scoped, tag = 'scoped memory for tpu_custom_call.1']
    #allocation7 [shape = 'u8[16384]{0}', space=vmem, size = 0x4000, scoped, tag = 'input window, operand 3, single buffered']
    #allocation8 [shape = 'u8[8192]{0}', space=vmem, size = 0x2000, scoped, tag = 'output window, operand 0, single buffered']
    %12 = vsyncpa [#allocation3], 0
    %13 = vsyncpa [#allocation6], 0
    %14 = vsyncpa [#allocation4], 0
    // Predicated region
    $region2: #{tpu_custom_call.1} parent=1 // pred_check
      _
    $region3: #{tpu_custom_call.1} parent=1 // pred_check_branch
      %16 = sbr.rel (0) target = $region5
    $region4: #{tpu_custom_call.1} parent=1 // pred_region
      %s18 = ssub.s32 256, 256
      %19 = vsyncadd [#allocation3], %s18
      %s20 = sshll.u32 [#allocation2], 4
      %s21 = int_to_ptr.vmem [resolvable:$true] %s20
      %26 = dma.hbm_to_vmem [thread:$0]  %s0, 256, %s21, [#allocation3], 128, 128, 8
    $region5: #{tpu_custom_call.1} parent=1 // pred_fallthru
      _
    // Predicated region
    $region6: #{tpu_custom_call.1} parent=1 // pred_check
      _
    $region7: #{tpu_custom_call.1} parent=1 // pred_check_branch
      %28 = sbr.rel (0) target = $region9
    $region8: #{tpu_custom_call.1} parent=1 // pred_region
      %s30 = ssub.s32 512, 512
      %31 = vsyncadd [#allocation6], %s30
      %s32 = sshll.u32 [#allocation5], 4
      %s33 = int_to_ptr.vmem [resolvable:$true] %s32
      %38 = dma.hbm_to_vmem [thread:$0]  %s1, 512, %s33, [#allocation6], 128, 128, 8
    $region9: #{tpu_custom_call.1} parent=1 // pred_fallthru
      _
    // Predicated region
    $region10: #{tpu_custom_call.1} parent=1 // pred_check
      _
    $region11: #{tpu_custom_call.1} parent=1 // pred_check_branch
      %40 = sbr.rel (0) target = $region13
    $region12: #{tpu_custom_call.1} parent=1 // pred_region
      _
    $region13: #{tpu_custom_call.1} parent=1 // pred_fallthru
      _
    // Predicated region
    $region14: #{tpu_custom_call.1} parent=1 // pred_check
      _
    $region15: #{tpu_custom_call.1} parent=1 // pred_check_branch
      %42 = sbr.rel (0) target = $region17
    $region16: #{tpu_custom_call.1} parent=1 // pred_region
      %s44 = ssub.s32 512, 512
      %45 = vsyncadd [#allocation6], %s44
      %s46 = sshll.u32 [#allocation7], 4
      %s47 = int_to_ptr.vmem [resolvable:$true] %s46
      %52 = dma.hbm_to_vmem [thread:$0]  %s3, 512, %s47, [#allocation6], 128, 128, 8
    $region17: #{tpu_custom_call.1} parent=1 // pred_fallthru
      _
    // Predicated region
    $region18: #{tpu_custom_call.1} parent=1 // pred_check
      _
    $region19: #{tpu_custom_call.1} parent=1 // pred_check_branch
      %54 = sbr.rel (0) target = $region21
    $region20: #{tpu_custom_call.1} parent=1 // pred_region
      _
    $region21: #{tpu_custom_call.1} parent=1 // pred_fallthru
      _
    // Predicated region
    $region22: #{tpu_custom_call.1} parent=1 // pred_check
      _
    $region23: #{tpu_custom_call.1} parent=1 // pred_check_branch
      %56 = sbr.rel (0) target = $region25
    $region24: #{tpu_custom_call.1} parent=1 // pred_region
      _
    $region25: #{tpu_custom_call.1} parent=1 // pred_fallthru
      _
    // Predicated region
    $region26: #{tpu_custom_call.1} parent=1 // pred_check
      _
    $region27: #{tpu_custom_call.1} parent=1 // pred_check_branch
      %58 = sbr.rel (0) target = $region29
    $region28: #{tpu_custom_call.1} parent=1 // pred_region
      _
    $region29: #{tpu_custom_call.1} parent=1 // pred_fallthru
      _
    // Predicated region
    $region30: #{tpu_custom_call.1} parent=1 // pred_check
      _
    $region31: #{tpu_custom_call.1} parent=1 // pred_check_branch
      %60 = sbr.rel (0) target = $region33
    $region32: #{tpu_custom_call.1} parent=1 // pred_region
      %61 = dma.done [#allocation3], 256
    $region33: #{tpu_custom_call.1} parent=1 // pred_fallthru
      _
    // Predicated region
    $region34: #{tpu_custom_call.1} parent=1 // pred_check
      _
    $region35: #{tpu_custom_call.1} parent=1 // pred_check_branch
      %63 = sbr.rel (0) target = $region37
    $region36: #{tpu_custom_call.1} parent=1 // pred_region
      %64 = dma.done [#allocation6], 512
    $region37: #{tpu_custom_call.1} parent=1 // pred_fallthru
      _
    // Predicated region
    $region38: #{tpu_custom_call.1} parent=1 // pred_check
      _
    $region39: #{tpu_custom_call.1} parent=1 // pred_check_branch
      %66 = sbr.rel (0) target = $region41
    $region40: #{tpu_custom_call.1} parent=1 // pred_region
      %67 = dma.done [#allocation6], 512
    $region41: #{tpu_custom_call.1} parent=1 // pred_fallthru
      _
    %v68 = vld [vmem:[#allocation2] sm:$0xff]
    %v69 = vld [vmem:[#allocation2 + $0x8] sm:$0xff]
    %v70 = vld [vmem:[#allocation5] sm:$0xff]
    %v71 = vld [vmem:[#allocation5 + $0x8] sm:$0xff]
    %v72 = vld [vmem:[#allocation5 + $0x10] sm:$0xff]
    %v73 = vld [vmem:[#allocation5 + $0x18] sm:$0xff]
    %v74 = vld [vmem:[%s2] sm:$0x1]
    %v76 = vlaneseq
    %v77 = vshrl.u32 %v76, 7
    %v78 = vsub.s32 0, %v77
    %v79 = vrot.slane %v74, %v78
    %vm81 = vcmask 261120
    %v83 = vsel %vm81, %v68, 0
    %v86 = vsel %vm81, %v69, 0
    %88 = vmatprep.subr.mxu0 0.0
    %89 = vmatpush1.msra.mxu0 %v70
    %90 = vmatprep.subr.mxu0 0.0
    %91 = vmatpush1.msra.mxu0 %v71
    %92 = vmatprep.subr.mxu0 0.0
    %93 = vmatpush1.msra.mxu0 %v72
    %94 = vmatprep.subr.mxu0 0.0
    %95 = vmatpush1.msra.mxu0 %v73
    %96 = vmatprep.subr.mxu0 0.0
    %97 = vmatpush1.msra.mxu0 0.0
    %98 = vmatprep.subr.mxu0 0.0
    %99 = vmatpush1.msra.mxu0 0.0
    %100 = vmatprep.subr.mxu0 0.0
    %101 = vmatpush1.msra.mxu0 0.0
    %102 = vmatprep.subr.mxu0 0.0
    %103 = vmatpush1.msra.mxu0 0.0
    %104 = vmatprep.subr.mxu0 0.0
    %105 = vmatpush1.msra.mxu0 0.0
    %106 = vmatprep.subr.mxu0 0.0
    %107 = vmatpush1.msra.mxu0 0.0
    %108 = vmatprep.subr.mxu0 0.0
    %109 = vmatpush1.msra.mxu0 0.0
    %110 = vmatprep.subr.mxu0 0.0
    %111 = vmatpush1.msra.mxu0 0.0
    %112 = vmatprep.subr.mxu0 0.0
    %113 = vmatpush1.msra.mxu0 0.0
    %114 = vmatprep.subr.mxu0 0.0
    %115 = vmatpush1.msra.mxu0 0.0
    %116 = vmatprep.subr.mxu0 0.0
    %117 = vmatpush1.msra.mxu0 0.0
    %118 = vmatprep.subr.mxu0 0.0
    %119 = vmatpush1.msra.mxu0 0.0
    %120 = vmatprep.subr.mxu0 0.0
    %121 = vmatpush1.msra.mxu0 0.0
    %122 = vmatprep.subr.mxu0 0.0
    %123 = vmatpush1.msra.mxu0 0.0
    %124 = vmatprep.subr.mxu0 0.0
    %125 = vmatpush1.msra.mxu0 0.0
    %126 = vmatprep.subr.mxu0 0.0
    %127 = vmatpush1.msra.mxu0 0.0
    %128 = vmatprep.subr.mxu0 0.0
    %129 = vmatpush1.msra.mxu0 0.0
    %130 = vmatprep.subr.mxu0 0.0
    %131 = vmatpush1.msra.mxu0 0.0
    %132 = vmatprep.subr.mxu0 0.0
    %133 = vmatpush1.msra.mxu0 0.0
    %134 = vmatprep.subr.mxu0 0.0
    %135 = vmatpush1.msra.mxu0 0.0
    %136 = vmatprep.subr.mxu0 0.0
    %137 = vmatpush1.msra.mxu0 0.0
    %138 = vmatprep.subr.mxu0 0.0
    %139 = vmatpush1.msra.mxu0 0.0
    %140 = vmatprep.subr.mxu0 0.0
    %141 = vmatpush1.msra.mxu0 0.0
    %142 = vmatprep.subr.mxu0 0.0
    %143 = vmatpush1.msra.mxu0 0.0
    %144 = vmatprep.subr.mxu0 0.0
    %145 = vmatpush1.msra.mxu0 0.0
    %146 = vmatprep.subr.mxu0 0.0
    %147 = vmatpush1.msra.mxu0 0.0
    %148 = vmatprep.subr.mxu0 0.0
    %149 = vmatpush1.msra.mxu0 0.0
    %150 = vmatprep.subr.mxu0 0.0
    %151 = vmatpush1.msra.mxu0 0.0
    %152 = vmatprep.mubr.f32.mxu0 0.0
    %153 = vmatmul.mubr.f32.gmra.mrb[0].mxu0 %v83
    %v154 = vpop.f32.mrb[0].mxu0
    %v155 = vadd.f32 %v79, %v154
    %v156 = vpop.f32.mrb[0].mxu0
    %157 = vmatprep.mubr.f32.mxu0 0.0
    %158 = vmatmul.mubr.f32.gmra.mrb[0].mxu0 %v86
    %v159 = vpop.f32.mrb[0].mxu0
    %v160 = vadd.f32 %v79, %v159
    %v161 = vpop.f32.mrb[0].mxu0
    %162 = vdwg.mxu0
    %v163 = vmul.f32 %v155, 0.5
    %v164 = vmul.f32 %v160, 0.5
    %v165 = vmul.f32 %v155, 0.70710677
    %v166 = vmul.f32 %v160, 0.70710677
    %v167 = verf.f32.pop %v165
    %v168 = verf.f32.pop %v166
    %v169 = vadd.f32 %v167, 1.0
    %v170 = vadd.f32 %v168, 1.0
    %v171 = vmul.f32 %v163, %v169
    %v172 = vmul.f32 %v164, %v170
    %v173 = vld [vmem:[#allocation7] sm:$0xff]
    %v174 = vld [vmem:[#allocation7 + $0x8] sm:$0xff]
    %v175 = vld [vmem:[#allocation7 + $0x10] sm:$0xff]
    %v176 = vld [vmem:[#allocation7 + $0x18] sm:$0xff]
    %v177 = vld [vmem:[%s4] sm:$0x1]
    %v179 = vlaneseq
    %v180 = vshrl.u32 %v179, 7
    %v181 = vsub.s32 0, %v180
    %v182 = vrot.slane %v177, %v181
    %v185 = vsel %vm81, %v171, 0
    %v188 = vsel %vm81, %v172, 0
    %190 = vmatprep.subr.mxu0 0.0
    %191 = vmatpush1.msra.mxu0 %v173
    %192 = vmatprep.subr.mxu0 0.0
    %193 = vmatpush1.msra.mxu0 %v174
    %194 = vmatprep.subr.mxu0 0.0
    %195 = vmatpush1.msra.mxu0 %v175
    %196 = vmatprep.subr.mxu0 0.0
    %197 = vmatpush1.msra.mxu0 %v176
    %198 = vmatprep.subr.mxu0 0.0
    %199 = vmatpush1.msra.mxu0 0.0
    %200 = vmatprep.subr.mxu0 0.0
    %201 = vmatpush1.msra.mxu0 0.0
    %202 = vmatprep.subr.mxu0 0.0
    %203 = vmatpush1.msra.mxu0 0.0
    %204 = vmatprep.subr.mxu0 0.0
    %205 = vmatpush1.msra.mxu0 0.0
    %206 = vmatprep.subr.mxu0 0.0
    %207 = vmatpush1.msra.mxu0 0.0
    %208 = vmatprep.subr.mxu0 0.0
    %209 = vmatpush1.msra.mxu0 0.0
    %210 = vmatprep.subr.mxu0 0.0
    %211 = vmatpush1.msra.mxu0 0.0
    %212 = vmatprep.subr.mxu0 0.0
    %213 = vmatpush1.msra.mxu0 0.0
    %214 = vmatprep.subr.mxu0 0.0
    %215 = vmatpush1.msra.mxu0 0.0
    %216 = vmatprep.subr.mxu0 0.0
    %217 = vmatpush1.msra.mxu0 0.0
    %218 = vmatprep.subr.mxu0 0.0
    %219 = vmatpush1.msra.mxu0 0.0
    %220 = vmatprep.subr.mxu0 0.0
    %221 = vmatpush1.msra.mxu0 0.0
    %222 = vmatprep.subr.mxu0 0.0
    %223 = vmatpush1.msra.mxu0 0.0
    %224 = vmatprep.subr.mxu0 0.0
    %225 = vmatpush1.msra.mxu0 0.0
    %226 = vmatprep.subr.mxu0 0.0
    %227 = vmatpush1.msra.mxu0 0.0
    %228 = vmatprep.subr.mxu0 0.0
    %229 = vmatpush1.msra.mxu0 0.0
    %230 = vmatprep.subr.mxu0 0.0
    %231 = vmatpush1.msra.mxu0 0.0
    %232 = vmatprep.subr.mxu0 0.0
    %233 = vmatpush1.msra.mxu0 0.0
    %234 = vmatprep.subr.mxu0 0.0
    %235 = vmatpush1.msra.mxu0 0.0
    %236 = vmatprep.subr.mxu0 0.0
    %237 = vmatpush1.msra.mxu0 0.0
    %238 = vmatprep.subr.mxu0 0.0
    %239 = vmatpush1.msra.mxu0 0.0
    %240 = vmatprep.subr.mxu0 0.0
    %241 = vmatpush1.msra.mxu0 0.0
    %242 = vmatprep.subr.mxu0 0.0
    %243 = vmatpush1.msra.mxu0 0.0
    %244 = vmatprep.subr.mxu0 0.0
    %245 = vmatpush1.msra.mxu0 0.0
    %246 = vmatprep.subr.mxu0 0.0
    %247 = vmatpush1.msra.mxu0 0.0
    %248 = vmatprep.subr.mxu0 0.0
    %249 = vmatpush1.msra.mxu0 0.0
    %250 = vmatprep.subr.mxu0 0.0
    %251 = vmatpush1.msra.mxu0 0.0
    %252 = vmatprep.subr.mxu0 0.0
    %253 = vmatpush1.msra.mxu0 0.0
    %254 = vmatprep.mubr.f32.mxu0 0.0
    %255 = vmatmul.mubr.f32.gmra.mrb[0].mxu0 %v185
    %v256 = vpop.f32.mrb[0].mxu0
    %v257 = vadd.f32 %v182, %v256
    %v258 = vpop.f32.mrb[0].mxu0
    %259 = vmatprep.mubr.f32.mxu0 0.0
    %260 = vmatmul.mubr.f32.gmra.mrb[0].mxu0 %v188
    %v261 = vpop.f32.mrb[0].mxu0
    %v262 = vadd.f32 %v182, %v261
    %v263 = vpop.f32.mrb[0].mxu0
    %264 = vdwg.mxu0
    %v265 = vadd.f32 %v257, %v155
    %v266 = vadd.f32 %v262, %v160
    %v267 = vsel %vm81, %v265, 0.0
    %268 = vadd.xlane.f32.xlu0 %v267
    %v269 = vpop.xlane.xlu0 %268
    %v270 = vsel %vm81, %v266, 0.0
    %271 = vadd.xlane.f32.xlu0 %v270
    %v272 = vpop.xlane.xlu0 %271
    %v273 = vmul.f32 %v265, %v265
    %v274 = vmul.f32 %v266, %v266
    %v275 = vsel %vm81, %v273, 0.0
    %276 = vadd.xlane.f32.xlu0 %v275
    %v277 = vpop.xlane.xlu0 %276
    %v278 = vsel %vm81, %v274, 0.0
    %279 = vadd.xlane.f32.xlu0 %v278
    %v280 = vpop.xlane.xlu0 %279
    %v281 = vmul.f32 %v269, 0.03125
    %v282 = vmul.f32 %v272, 0.03125
    %v283 = vmul.f32 %v277, 0.03125
    %v284 = vmul.f32 %v280, 0.03125
    %v285 = vmul.f32 %v281, %v281
    %v286 = vmul.f32 %v282, %v282
    %v287 = vsub.f32 %v283, %v285
    %v288 = vsub.f32 %v284, %v286
    %v289 = vsub.f32 %v265, %v281
    %v290 = vsub.f32 %v266, %v282
    %v291 = vadd.f32 %v287, 1e-05
    %v292 = vadd.f32 %v288, 1e-05
    %v293 = vrsqrt.pop %v291
    %v294 = vrsqrt.pop %v292
    %v295 = vmul.f32 %v289, %v293
    %v296 = vmul.f32 %v290, %v294
    %v297 = vld [vmem:[%s5] sm:$0x1]
    %v299 = vlaneseq
    %v300 = vshrl.u32 %v299, 7
    %v301 = vsub.s32 0, %v300
    %v302 = vrot.slane %v297, %v301
    %v304 = vmul.f32 %v295, %v302
    %v305 = vmul.f32 %v296, %v302
    %v306 = vld [vmem:[%s6] sm:$0x1]
    %v308 = vlaneseq
    %v309 = vshrl.u32 %v308, 7
    %v310 = vsub.s32 0, %v309
    %v311 = vrot.slane %v306, %v310
    %v313 = vadd.f32 %v304, %v311
    %v314 = vadd.f32 %v305, %v311
    %315 = vst.msk [vmem:[#allocation8] sm:$0xff] %vm81, %v313
    %316 = vst.msk [vmem:[#allocation8 + $0x8] sm:$0xff] %vm81, %v314
    // Predicated region
    $region42: #{tpu_custom_call.1} parent=1 // pred_check
      _
    $region43: #{tpu_custom_call.1} parent=1 // pred_check_branch
      %318 = sbr.rel (0) target = $region45
    $region44: #{tpu_custom_call.1} parent=1 // pred_region
      %s320 = ssub.s32 256, 256
      %321 = vsyncadd [#allocation4], %s320
      %s322 = sshll.u32 [#allocation8], 4
      %s323 = int_to_ptr.vmem [resolvable:$true] %s322
      %328 = dma.vmem_to_hbm [thread:$0]  %s323, 256, %s7, [#allocation4], 128, 128, 8
    $region45: #{tpu_custom_call.1} parent=1 // pred_fallthru
      _
    // Predicated region
    $region46: #{tpu_custom_call.1} parent=1 // pred_check
      _
    $region47: #{tpu_custom_call.1} parent=1 // pred_check_branch
      %330 = sbr.rel (0) target = $region49
    $region48: #{tpu_custom_call.1} parent=1 // pred_region
      %331 = dma.done [#allocation4], 256
    $region49: #{tpu_custom_call.1} parent=1 // pred_fallthru
      _
    %332 = vsyncpa [#allocation3], 1
    %333 = vsyncpa [#allocation6], 1
    %334 = vsyncpa [#allocation4], 1

</llo_original>
